<compile_context>
chip_gen: v5e
topology: v5e:2x2
jax: 0.10.0
libtpu: 0.0.40
codegen_flags: <defaults>
</compile_context>

<pallas_src>
import functools
import math

import jax
import jax.numpy as jnp
from jax.experimental import pallas as pl
from jax.experimental.pallas import tpu as pltpu


def _sigmoid(z):
    # tanh-based sigmoid: numerically robust (no inf intermediates), uses EUP tanh.
    return 0.5 * (jnp.tanh(0.5 * z) + 1.0)


def _vcopn_rnn_kernel(x_ref, sel_ref, wrow_ref, bb_ref, wih_ref, whh_ref,
                      bl_ref, wfc_ref, bfc_ref, o_ref, acc_ref, *,
                      b_sub, seq_len, s_total, s_axis, mask_last):
    rows, s_chunk = x_ref.shape
    acc_lanes = acc_ref.shape[1]
    feat = wih_ref.shape[0]
    hid = whh_ref.shape[0]

    s_idx = pl.program_id(s_axis)

    @pl.when(s_idx == 0)
    def _init():
        acc_ref[...] = jnp.zeros_like(acc_ref)

    # ---- streamed global-average-pool: lane-resident partial sums ----------
    xc = x_ref[...].astype(jnp.float32)                       # (rows, s_chunk)

    if mask_last:
        # Boundary block of a non-divisible grid is NOT zero-filled by Pallas:
        # zero lanes past the true S extent (always-true compare elsewhere).
        lane = jax.lax.broadcasted_iota(jnp.int32, (rows, s_chunk), 1)
        xc = jnp.where(lane < (s_total - s_idx * s_chunk), xc, 0.0)

    if s_chunk > acc_lanes:
        # Fold 128-lane sub-chunks with pure VALU adds; the single cross-lane
        # reduce happens once in the tail (keeps the XLU off the hot path).
        part = acc_ref[...]
        for j in range(s_chunk // acc_lanes):
            part = part + xc[:, j * acc_lanes:(j + 1) * acc_lanes]
        acc_ref[...] = part
    else:
        acc_ref[...] += xc

    # ---- once, at the last S step: base Linear + LSTM + fc -----------------
    @pl.when(s_idx == pl.num_programs(s_axis) - 1)
    def _tail():
        rsum = jnp.sum(acc_ref[...], axis=-1, keepdims=True)    # (rows, 1)
        # feats[bl, f] = sum_c mean_pool[bl, c] * wb[c, f]; sel/wrow encode the
        # (rows,) -> (b*L, C) regrouping so no lane-changing reshape is needed
        # in-kernel; wrow already carries the 1/S mean factor.
        feats = jnp.dot(sel_ref[...], rsum * wrow_ref[...],
                        preferred_element_type=jnp.float32)     # (b_sub*L, F)
        feats = jnp.maximum(feats + bb_ref[...], 0.0)
        feats = feats.reshape(b_sub, seq_len, feat)

        w_ih = wih_ref[...]
        w_hh = whh_ref[...]
        b = bl_ref[...]
        h = jnp.zeros((b_sub, hid), jnp.float32)
        c = jnp.zeros((b_sub, hid), jnp.float32)
        for t in range(seq_len):                 # PyTorch gate order: i, f, g, o
            gates = (jnp.dot(feats[:, t, :], w_ih, preferred_element_type=jnp.float32)
                     + jnp.dot(h, w_hh, preferred_element_type=jnp.float32)
                     + b)                                        # (b_sub, 4H)
            i_g = _sigmoid(gates[:, 0 * hid:1 * hid])
            f_g = _sigmoid(gates[:, 1 * hid:2 * hid])
            g_g = jnp.tanh(gates[:, 2 * hid:3 * hid])
            o_g = _sigmoid(gates[:, 3 * hid:4 * hid])
            c = f_g * c + i_g * g_g
            h = o_g * jnp.tanh(c)

        out = jnp.dot(h, wfc_ref[...], preferred_element_type=jnp.float32) + bfc_ref[...]
        o_ref[...] = out.astype(o_ref.dtype)


def _wants_batch_split():
    """v7x has 2 TensorCores/chip: shard the batch grid axis across them."""
    try:
        kind = jax.devices()[0].device_kind.lower()
    except Exception:
        return False
    return ("v7" in kind) or ("7x" in kind)


def vcopn_rnn_forward(x, wb, bb, w_ih, w_hh, b_lstm, wfc, bfc, *,
                      s_chunk=4096, split_batch=None):
    """VCOPN_RNN forward.  x: (B, L, C, T, H, W); weights stored (in, out)."""
    B, L, C, T, Hh, Ww = x.shape
    S = T * Hh * Ww
    F = wb.shape[1]
    H = w_hh.shape[0]
    class_num = wfc.shape[1]

    if split_batch is None:
        split_batch = _wants_batch_split()

    # ---- S-chunk sizing: lane-aligned multiple of 128 (or all of S if small).
    if S < 128:
        s_chunk_eff = S
    else:
        s_chunk_eff = max(128, min((s_chunk // 128) * 128, (S // 128) * 128))
    n_chunks = pl.cdiv(S, s_chunk_eff)
    mask_last = (S % s_chunk_eff) != 0
    acc_lanes = 128 if s_chunk_eff % 128 == 0 else s_chunk_eff

    # ---- tiny constant operands (no full-tensor copies of x anywhere).
    b_sub = 1 if split_batch else B
    rows = b_sub * L * C
    sel = jnp.repeat(jnp.eye(b_sub * L, dtype=jnp.float32), C, axis=1)  # (bL, rows)
    wrow = jnp.tile(wb.astype(jnp.float32), (b_sub * L, 1)) * (1.0 / float(S))

    # fc class dim padded to a full lane width => lane-dense output store.
    class_pad = ((class_num + 127) // 128) * 128
    wfc_p = jnp.pad(wfc, ((0, 0), (0, class_pad - class_num)))
    bfc_p = jnp.pad(bfc, ((0, 0), (0, class_pad - class_num)))

    const2 = lambda *_: (0, 0)
    w_specs = [
        pl.BlockSpec((b_sub * L, rows), const2),        # sel
        pl.BlockSpec((rows, F), const2),                # wrow (wb tiled, * 1/S)
        pl.BlockSpec((1, F), const2),                   # bb
        pl.BlockSpec((F, 4 * H), const2),               # LSTM W_ih
        pl.BlockSpec((H, 4 * H), const2),               # LSTM W_hh
        pl.BlockSpec((1, 4 * H), const2),               # LSTM b_ih + b_hh
        pl.BlockSpec((H, class_pad), const2),           # fc W (padded)
        pl.BlockSpec((1, class_pad), const2),           # fc b (padded)
    ]

    if split_batch:
        # Leading batch axis marked "parallel" (v7x: 2 TCs stream disjoint b);
        # the S reduction axis stays last and "arbitrary".
        x_view = x.reshape(B, L * C, S)                 # free row-major reshape
        grid = (B, n_chunks)
        x_spec = pl.BlockSpec((None, rows, s_chunk_eff), lambda b, s: (b, 0, s))
        out_shape = jax.ShapeDtypeStruct((B, 1, class_pad), jnp.float32)
        out_spec = pl.BlockSpec((None, 1, class_pad), lambda b, s: (b, 0, 0))
        dims = ("parallel", "arbitrary")
        s_axis = 1
    else:
        # Dense 2D layout: B*L*C rows on sublanes, S streamed across lanes.
        x_view = x.reshape(B * L * C, S)                # free row-major reshape
        grid = (n_chunks,)
        x_spec = pl.BlockSpec((rows, s_chunk_eff), lambda s: (0, s))
        out_shape = jax.ShapeDtypeStruct((B, class_pad), jnp.float32)
        out_spec = pl.BlockSpec((B, class_pad), lambda s: (0, 0))
        dims = ("arbitrary",)
        s_axis = 0

    kernel = functools.partial(
        _vcopn_rnn_kernel, b_sub=b_sub, seq_len=L, s_total=S,
        s_axis=s_axis, mask_last=mask_last)

    grid_spec = pltpu.PrefetchScalarGridSpec(
        num_scalar_prefetch=0,
        grid=grid,
        in_specs=[x_spec] + w_specs,
        out_specs=out_spec,
        scratch_shapes=[pltpu.VMEM((rows, acc_lanes), jnp.float32)],
    )

    out_padded = pl.pallas_call(
        kernel,
        out_shape=out_shape,
        grid_spec=grid_spec,
        compiler_params=pltpu.CompilerParams(
            dimension_semantics=dims,
            vmem_limit_bytes=32 * 1024 * 1024,
        ),
    )(x_view, sel, wrow, bb, w_ih, w_hh, b_lstm, wfc_p, bfc_p)

    if split_batch:
        out_padded = out_padded[:, 0, :]
    return out_padded[:, :class_num]


def _uniform(key, shape, bound):
    return jax.random.uniform(key, shape, jnp.float32, -bound, bound)


if __name__ == "__main__":
    # Small shapes consistent with the module's forward.
    B, L = 2, 3                       # batch, tuple_len
    C, T, Hv, Wv = 4, 4, 10, 16       # clip: channels, frames, height, width (S=640)
    feature_size = 32                 # base_network output dim
    hidden_size = 32                  # LSTM hidden size
    class_num = math.factorial(L)     # 6

    root = jax.random.PRNGKey(0)
    kx, k1, k2, k3, k4, k5, k6, k7, k8 = jax.random.split(root, 9)

    # Input tuple of clips: (B, L, C, T, H, W).
    x = jax.random.normal(kx, (B, L, C, T, Hv, Wv), jnp.float32)

    # Deterministic torch-style params, weights stored (in_features, out_features).
    bb_bound = 1.0 / math.sqrt(C)
    wb = _uniform(k1, (C, feature_size), bb_bound)
    bb = _uniform(k2, (1, feature_size), bb_bound)

    lstm_bound = 1.0 / math.sqrt(hidden_size)
    w_ih = _uniform(k3, (feature_size, 4 * hidden_size), lstm_bound)
    w_hh = _uniform(k4, (hidden_size, 4 * hidden_size), lstm_bound)
    b_ih = _uniform(k5, (1, 4 * hidden_size), lstm_bound)
    b_hh = _uniform(k6, (1, 4 * hidden_size), lstm_bound)
    b_lstm = b_ih + b_hh

    fc_bound = 1.0 / math.sqrt(hidden_size)
    wfc = _uniform(k7, (hidden_size, class_num), fc_bound)
    bfc = _uniform(k8, (1, class_num), fc_bound)

    # ---- pure-JAX reference (f32 end to end) --------------------------------
    S = T * Hv * Wv
    pooled = jnp.mean(x.reshape(B, L, C, S), axis=-1)
    feats = jnp.maximum(pooled.reshape(B * L, C) @ wb + bb, 0.0)
    feats = feats.reshape(B, L, feature_size)
    sig = lambda z: 0.5 * (jnp.tanh(0.5 * z) + 1.0)
    Hh = hidden_size
    h = jnp.zeros((B, Hh), jnp.float32)
    c = jnp.zeros((B, Hh), jnp.float32)
    for t in range(L):
        gates = feats[:, t, :] @ w_ih + h @ w_hh + b_lstm
        i_g = sig(gates[:, 0 * Hh:1 * Hh])
        f_g = sig(gates[:, 1 * Hh:2 * Hh])
        g_g = jnp.tanh(gates[:, 2 * Hh:3 * Hh])
        o_g = sig(gates[:, 3 * Hh:4 * Hh])
        c = f_g * c + i_g * g_g
        h = o_g * jnp.tanh(c)
    ref = h @ wfc + bfc

    # ---- exercise all kernel code paths and compare against the reference ---
    configs = [
        dict(s_chunk=4096, split_batch=False),   # single chunk, dense rows
        dict(s_chunk=256, split_batch=False),    # multi-chunk + ragged-lane mask
        dict(s_chunk=256, split_batch=True),     # v7x-style parallel batch axis
    ]
    for cfg in configs:
        out = vcopn_rnn_forward(x, wb, bb, w_ih, w_hh, b_lstm, wfc, bfc, **cfg)
        out = jax.block_until_ready(out)
        assert out.shape == (B, class_num), (out.shape, cfg)
        assert jnp.allclose(out, ref, atol=2e-3, rtol=2e-3), ("mismatch", cfg)

    print("KERNEL_OK")
</pallas_src>

<mosaic_0001>
module attributes {stable_mosaic.version = 11 : i64} {
  func.func @_vcopn_rnn_kernel(%arg0: i32, %arg1: memref<24x640xf32, #tpu.memory_space<vmem>>, %arg2: memref<6x24xf32, #tpu.memory_space<vmem>>, %arg3: memref<24x32xf32, #tpu.memory_space<vmem>>, %arg4: memref<1x32xf32, #tpu.memory_space<vmem>>, %arg5: memref<32x128xf32, #tpu.memory_space<vmem>>, %arg6: memref<32x128xf32, #tpu.memory_space<vmem>>, %arg7: memref<1x128xf32, #tpu.memory_space<vmem>>, %arg8: memref<32x128xf32, #tpu.memory_space<vmem>>, %arg9: memref<1x128xf32, #tpu.memory_space<vmem>>, %arg10: memref<2x128xf32, #tpu.memory_space<vmem>>, %arg11: memref<24x128xf32, #tpu.memory_space<vmem>>) attributes {dimension_semantics = [#tpu.dimension_semantics<arbitrary>], iteration_bounds = array<i64: 1>, scalar_prefetch = 0 : i64, scratch_operands = 1 : i64, tpu.core_type = #tpu.core_type<tc>, window_params = [{transform_indices = @transform_0, window_bounds = array<i64: 24, 640>}, {pipeline_mode = #tpu.pipeline_mode<synchronous>, transform_indices = @transform_1, window_bounds = array<i64: 6, 24>}, {pipeline_mode = #tpu.pipeline_mode<synchronous>, transform_indices = @transform_2, window_bounds = array<i64: 24, 32>}, {pipeline_mode = #tpu.pipeline_mode<synchronous>, transform_indices = @transform_3, window_bounds = array<i64: 1, 32>}, {pipeline_mode = #tpu.pipeline_mode<synchronous>, transform_indices = @transform_4, window_bounds = array<i64: 32, 128>}, {pipeline_mode = #tpu.pipeline_mode<synchronous>, transform_indices = @transform_5, window_bounds = array<i64: 32, 128>}, {pipeline_mode = #tpu.pipeline_mode<synchronous>, transform_indices = @transform_6, window_bounds = array<i64: 1, 128>}, {pipeline_mode = #tpu.pipeline_mode<synchronous>, transform_indices = @transform_7, window_bounds = array<i64: 32, 128>}, {pipeline_mode = #tpu.pipeline_mode<synchronous>, transform_indices = @transform_8, window_bounds = array<i64: 1, 128>}, {pipeline_mode = #tpu.pipeline_mode<synchronous>, transform_indices = @transform_9, window_bounds = array<i64: 2, 128>}]} {
    %c0_i32 = arith.constant 0 : i32
    %0 = arith.cmpi eq, %arg0, %c0_i32 : i32
    %1 = arith.extui %0 : i1 to i32
    %c0_i32_0 = arith.constant 0 : i32
    %2 = arith.cmpi ne, %1, %c0_i32_0 : i32
    scf.if %2 {
      %cst = arith.constant 0.000000e+00 : f32
      %19 = vector.broadcast %cst : f32 to vector<24x128xf32>
      %c0_8 = arith.constant 0 : index
      %c0_9 = arith.constant 0 : index
      %20 = vector.load %arg11[%c0_8, %c0_9] : memref<24x128xf32, #tpu.memory_space<vmem>>, vector<24x128xf32>
      tpu.vector_store %arg11[%c0_8, %c0_9], %19 {strides = array<i32>} : memref<24x128xf32, #tpu.memory_space<vmem>>, vector<24x128xf32>,
    } else {
    }
    %c0 = arith.constant 0 : index
    %c0_1 = arith.constant 0 : index
    %3 = vector.load %arg1[%c0, %c0_1] : memref<24x640xf32, #tpu.memory_space<vmem>>, vector<24x640xf32>
    %c0_2 = arith.constant 0 : index
    %c0_3 = arith.constant 0 : index
    %4 = vector.load %arg11[%c0_2, %c0_3] : memref<24x128xf32, #tpu.memory_space<vmem>>, vector<24x128xf32>
    %5 = vector.extract_strided_slice %3 {offsets = [0, 0], sizes = [24, 128], strides = [1, 1]} : vector<24x640xf32> to vector<24x128xf32>
    %6 = arith.addf %4, %5 : vector<24x128xf32>
    %7 = vector.extract_strided_slice %3 {offsets = [0, 128], sizes = [24, 128], strides = [1, 1]} : vector<24x640xf32> to vector<24x128xf32>
    %8 = arith.addf %6, %7 : vector<24x128xf32>
    %9 = vector.extract_strided_slice %3 {offsets = [0, 256], sizes = [24, 128], strides = [1, 1]} : vector<24x640xf32> to vector<24x128xf32>
    %10 = arith.addf %8, %9 : vector<24x128xf32>
    %11 = vector.extract_strided_slice %3 {offsets = [0, 384], sizes = [24, 128], strides = [1, 1]} : vector<24x640xf32> to vector<24x128xf32>
    %12 = arith.addf %10, %11 : vector<24x128xf32>
    %13 = vector.extract_strided_slice %3 {offsets = [0, 512], sizes = [24, 128], strides = [1, 1]} : vector<24x640xf32> to vector<24x128xf32>
    %14 = arith.addf %12, %13 : vector<24x128xf32>
    %c0_4 = arith.constant 0 : index
    %c0_5 = arith.constant 0 : index
    %15 = vector.load %arg11[%c0_4, %c0_5] : memref<24x128xf32, #tpu.memory_space<vmem>>, vector<24x128xf32>
    tpu.vector_store %arg11[%c0_4, %c0_5], %14 {strides = array<i32>} : memref<24x128xf32, #tpu.memory_space<vmem>>, vector<24x128xf32>,
    %c0_i32_6 = arith.constant 0 : i32
    %16 = arith.cmpi eq, %arg0, %c0_i32_6 : i32
    %17 = arith.extui %16 : i1 to i32
    %c0_i32_7 = arith.constant 0 : i32
    %18 = arith.cmpi ne, %17, %c0_i32_7 : i32
    scf.if %18 {
      %c0_8 = arith.constant 0 : index
      %c0_9 = arith.constant 0 : index
      %19 = vector.load %arg11[%c0_8, %c0_9] : memref<24x128xf32, #tpu.memory_space<vmem>>, vector<24x128xf32>
      %cst = arith.constant dense<0.000000e+00> : vector<24xf32>
      %20 = vector.multi_reduction <add>, %19, %cst [1] : vector<24x128xf32> to vector<24xf32>
      %21 = vector.shape_cast %20 : vector<24xf32> to vector<24x1xf32>
      %c0_10 = arith.constant 0 : index
      %c0_11 = arith.constant 0 : index
      %22 = vector.load %arg2[%c0_10, %c0_11] : memref<6x24xf32, #tpu.memory_space<vmem>>, vector<6x24xf32>
      %c0_12 = arith.constant 0 : index
      %c0_13 = arith.constant 0 : index
      %23 = vector.load %arg3[%c0_12, %c0_13] : memref<24x32xf32, #tpu.memory_space<vmem>>, vector<24x32xf32>
      %24 = vector.broadcast %21 : vector<24x1xf32> to vector<24x32xf32>
      %25 = arith.mulf %24, %23 : vector<24x32xf32>
      %cst_14 = arith.constant dense<0.000000e+00> : vector<6x32xf32>
      %26 = tpu.matmul %22, %25, %cst_14 {dimension_numbers = #tpu.dot_dimension_numbers<[1], [0], [0], [1], [0, 0, 1, 1], [], []>} : vector<6x24xf32>, vector<24x32xf32>, vector<6x32xf32> -> vector<6x32xf32>
      %c0_15 = arith.constant 0 : index
      %c0_16 = arith.constant 0 : index
      %27 = vector.load %arg4[%c0_15, %c0_16] : memref<1x32xf32, #tpu.memory_space<vmem>>, vector<1x32xf32>
      %28 = vector.broadcast %27 : vector<1x32xf32> to vector<6x32xf32>
      %29 = arith.addf %26, %28 : vector<6x32xf32>
      %cst_17 = arith.constant 0.000000e+00 : f32
      %30 = vector.broadcast %cst_17 : f32 to vector<6x32xf32>
      %31 = arith.maximumf %29, %30 : vector<6x32xf32>
      %32 = vector.shape_cast %31 : vector<6x32xf32> to vector<2x3x32xf32>
      %c0_18 = arith.constant 0 : index
      %c0_19 = arith.constant 0 : index
      %33 = vector.load %arg5[%c0_18, %c0_19] : memref<32x128xf32, #tpu.memory_space<vmem>>, vector<32x128xf32>
      %c0_20 = arith.constant 0 : index
      %c0_21 = arith.constant 0 : index
      %34 = vector.load %arg6[%c0_20, %c0_21] : memref<32x128xf32, #tpu.memory_space<vmem>>, vector<32x128xf32>
      %c0_22 = arith.constant 0 : index
      %c0_23 = arith.constant 0 : index
      %35 = vector.load %arg7[%c0_22, %c0_23] : memref<1x128xf32, #tpu.memory_space<vmem>>, vector<1x128xf32>
      %cst_24 = arith.constant 0.000000e+00 : f32
      %36 = vector.broadcast %cst_24 : f32 to vector<2x32xf32>
      %cst_25 = arith.constant 0.000000e+00 : f32
      %37 = vector.broadcast %cst_25 : f32 to vector<2x32xf32>
      %38 = vector.extract_strided_slice %32 {offsets = [0, 0, 0], sizes = [2, 1, 32], strides = [1, 1, 1]} : vector<2x3x32xf32> to vector<2x1x32xf32>
      %39 = vector.shape_cast %38 : vector<2x1x32xf32> to vector<2x32xf32>
      %cst_26 = arith.constant dense<0.000000e+00> : vector<2x128xf32>
      %40 = tpu.matmul %39, %33, %cst_26 {dimension_numbers = #tpu.dot_dimension_numbers<[1], [0], [0], [1], [0, 0, 1, 1], [], []>} : vector<2x32xf32>, vector<32x128xf32>, vector<2x128xf32> -> vector<2x128xf32>
      %cst_27 = arith.constant dense<0.000000e+00> : vector<2x128xf32>
      %41 = tpu.matmul %36, %34, %cst_27 {dimension_numbers = #tpu.dot_dimension_numbers<[1], [0], [0], [1], [0, 0, 1, 1], [], []>} : vector<2x32xf32>, vector<32x128xf32>, vector<2x128xf32> -> vector<2x128xf32>
      %42 = arith.addf %40, %41 : vector<2x128xf32>
      %43 = vector.broadcast %35 : vector<1x128xf32> to vector<2x128xf32>
      %44 = arith.addf %42, %43 : vector<2x128xf32>
      %45 = vector.extract_strided_slice %44 {offsets = [0, 0], sizes = [2, 32], strides = [1, 1]} : vector<2x128xf32> to vector<2x32xf32>
      %cst_28 = arith.constant 5.000000e-01 : f32
      %46 = vector.broadcast %cst_28 : f32 to vector<2x32xf32>
      %47 = arith.mulf %46, %45 : vector<2x32xf32>
      %48 = math.tanh %47 : vector<2x32xf32>
      %cst_29 = arith.constant 1.000000e+00 : f32
      %49 = vector.broadcast %cst_29 : f32 to vector<2x32xf32>
      %50 = arith.addf %48, %49 : vector<2x32xf32>
      %cst_30 = arith.constant 5.000000e-01 : f32
      %51 = vector.broadcast %cst_30 : f32 to vector<2x32xf32>
      %52 = arith.mulf %51, %50 : vector<2x32xf32>
      %53 = vector.extract_strided_slice %44 {offsets = [0, 32], sizes = [2, 32], strides = [1, 1]} : vector<2x128xf32> to vector<2x32xf32>
      %cst_31 = arith.constant 5.000000e-01 : f32
      %54 = vector.broadcast %cst_31 : f32 to vector<2x32xf32>
      %55 = arith.mulf %54, %53 : vector<2x32xf32>
      %56 = math.tanh %55 : vector<2x32xf32>
      %cst_32 = arith.constant 1.000000e+00 : f32
      %57 = vector.broadcast %cst_32 : f32 to vector<2x32xf32>
      %58 = arith.addf %56, %57 : vector<2x32xf32>
      %cst_33 = arith.constant 5.000000e-01 : f32
      %59 = vector.broadcast %cst_33 : f32 to vector<2x32xf32>
      %60 = arith.mulf %59, %58 : vector<2x32xf32>
      %61 = vector.extract_strided_slice %44 {offsets = [0, 64], sizes = [2, 32], strides = [1, 1]} : vector<2x128xf32> to vector<2x32xf32>
      %62 = math.tanh %61 : vector<2x32xf32>
      %63 = vector.extract_strided_slice %44 {offsets = [0, 96], sizes = [2, 32], strides = [1, 1]} : vector<2x128xf32> to vector<2x32xf32>
      %cst_34 = arith.constant 5.000000e-01 : f32
      %64 = vector.broadcast %cst_34 : f32 to vector<2x32xf32>
      %65 = arith.mulf %64, %63 : vector<2x32xf32>
      %66 = math.tanh %65 : vector<2x32xf32>
      %cst_35 = arith.constant 1.000000e+00 : f32
      %67 = vector.broadcast %cst_35 : f32 to vector<2x32xf32>
      %68 = arith.addf %66, %67 : vector<2x32xf32>
      %cst_36 = arith.constant 5.000000e-01 : f32
      %69 = vector.broadcast %cst_36 : f32 to vector<2x32xf32>
      %70 = arith.mulf %69, %68 : vector<2x32xf32>
      %71 = arith.mulf %60, %37 : vector<2x32xf32>
      %72 = arith.mulf %52, %62 : vector<2x32xf32>
      %73 = arith.addf %71, %72 : vector<2x32xf32>
      %74 = math.tanh %73 : vector<2x32xf32>
      %75 = arith.mulf %70, %74 : vector<2x32xf32>
      %76 = vector.extract_strided_slice %32 {offsets = [0, 1, 0], sizes = [2, 1, 32], strides = [1, 1, 1]} : vector<2x3x32xf32> to vector<2x1x32xf32>
      %77 = vector.shape_cast %76 : vector<2x1x32xf32> to vector<2x32xf32>
      %cst_37 = arith.constant dense<0.000000e+00> : vector<2x128xf32>
      %78 = tpu.matmul %77, %33, %cst_37 {dimension_numbers = #tpu.dot_dimension_numbers<[1], [0], [0], [1], [0, 0, 1, 1], [], []>} : vector<2x32xf32>, vector<32x128xf32>, vector<2x128xf32> -> vector<2x128xf32>
      %cst_38 = arith.constant dense<0.000000e+00> : vector<2x128xf32>
      %79 = tpu.matmul %75, %34, %cst_38 {dimension_numbers = #tpu.dot_dimension_numbers<[1], [0], [0], [1], [0, 0, 1, 1], [], []>} : vector<2x32xf32>, vector<32x128xf32>, vector<2x128xf32> -> vector<2x128xf32>
      %80 = arith.addf %78, %79 : vector<2x128xf32>
      %81 = vector.broadcast %35 : vector<1x128xf32> to vector<2x128xf32>
      %82 = arith.addf %80, %81 : vector<2x128xf32>
      %83 = vector.extract_strided_slice %82 {offsets = [0, 0], sizes = [2, 32], strides = [1, 1]} : vector<2x128xf32> to vector<2x32xf32>
      %cst_39 = arith.constant 5.000000e-01 : f32
      %84 = vector.broadcast %cst_39 : f32 to vector<2x32xf32>
      %85 = arith.mulf %84, %83 : vector<2x32xf32>
      %86 = math.tanh %85 : vector<2x32xf32>
      %cst_40 = arith.constant 1.000000e+00 : f32
      %87 = vector.broadcast %cst_40 : f32 to vector<2x32xf32>
      %88 = arith.addf %86, %87 : vector<2x32xf32>
      %cst_41 = arith.constant 5.000000e-01 : f32
      %89 = vector.broadcast %cst_41 : f32 to vector<2x32xf32>
      %90 = arith.mulf %89, %88 : vector<2x32xf32>
      %91 = vector.extract_strided_slice %82 {offsets = [0, 32], sizes = [2, 32], strides = [1, 1]} : vector<2x128xf32> to vector<2x32xf32>
      %cst_42 = arith.constant 5.000000e-01 : f32
      %92 = vector.broadcast %cst_42 : f32 to vector<2x32xf32>
      %93 = arith.mulf %92, %91 : vector<2x32xf32>
      %94 = math.tanh %93 : vector<2x32xf32>
      %cst_43 = arith.constant 1.000000e+00 : f32
      %95 = vector.broadcast %cst_43 : f32 to vector<2x32xf32>
      %96 = arith.addf %94, %95 : vector<2x32xf32>
      %cst_44 = arith.constant 5.000000e-01 : f32
      %97 = vector.broadcast %cst_44 : f32 to vector<2x32xf32>
      %98 = arith.mulf %97, %96 : vector<2x32xf32>
      %99 = vector.extract_strided_slice %82 {offsets = [0, 64], sizes = [2, 32], strides = [1, 1]} : vector<2x128xf32> to vector<2x32xf32>
      %100 = math.tanh %99 : vector<2x32xf32>
      %101 = vector.extract_strided_slice %82 {offsets = [0, 96], sizes = [2, 32], strides = [1, 1]} : vector<2x128xf32> to vector<2x32xf32>
      %cst_45 = arith.constant 5.000000e-01 : f32
      %102 = vector.broadcast %cst_45 : f32 to vector<2x32xf32>
      %103 = arith.mulf %102, %101 : vector<2x32xf32>
      %104 = math.tanh %103 : vector<2x32xf32>
      %cst_46 = arith.constant 1.000000e+00 : f32
      %105 = vector.broadcast %cst_46 : f32 to vector<2x32xf32>
      %106 = arith.addf %104, %105 : vector<2x32xf32>
      %cst_47 = arith.constant 5.000000e-01 : f32
      %107 = vector.broadcast %cst_47 : f32 to vector<2x32xf32>
      %108 = arith.mulf %107, %106 : vector<2x32xf32>
      %109 = arith.mulf %98, %73 : vector<2x32xf32>
      %110 = arith.mulf %90, %100 : vector<2x32xf32>
      %111 = arith.addf %109, %110 : vector<2x32xf32>
      %112 = math.tanh %111 : vector<2x32xf32>
      %113 = arith.mulf %108, %112 : vector<2x32xf32>
      %114 = vector.extract_strided_slice %32 {offsets = [0, 2, 0], sizes = [2, 1, 32], strides = [1, 1, 1]} : vector<2x3x32xf32> to vector<2x1x32xf32>
      %115 = vector.shape_cast %114 : vector<2x1x32xf32> to vector<2x32xf32>
      %cst_48 = arith.constant dense<0.000000e+00> : vector<2x128xf32>
      %116 = tpu.matmul %115, %33, %cst_48 {dimension_numbers = #tpu.dot_dimension_numbers<[1], [0], [0], [1], [0, 0, 1, 1], [], []>} : vector<2x32xf32>, vector<32x128xf32>, vector<2x128xf32> -> vector<2x128xf32>
      %cst_49 = arith.constant dense<0.000000e+00> : vector<2x128xf32>
      %117 = tpu.matmul %113, %34, %cst_49 {dimension_numbers = #tpu.dot_dimension_numbers<[1], [0], [0], [1], [0, 0, 1, 1], [], []>} : vector<2x32xf32>, vector<32x128xf32>, vector<2x128xf32> -> vector<2x128xf32>
      %118 = arith.addf %116, %117 : vector<2x128xf32>
      %119 = vector.broadcast %35 : vector<1x128xf32> to vector<2x128xf32>
      %120 = arith.addf %118, %119 : vector<2x128xf32>
      %121 = vector.extract_strided_slice %120 {offsets = [0, 0], sizes = [2, 32], strides = [1, 1]} : vector<2x128xf32> to vector<2x32xf32>
      %cst_50 = arith.constant 5.000000e-01 : f32
      %122 = vector.broadcast %cst_50 : f32 to vector<2x32xf32>
      %123 = arith.mulf %122, %121 : vector<2x32xf32>
      %124 = math.tanh %123 : vector<2x32xf32>
      %cst_51 = arith.constant 1.000000e+00 : f32
      %125 = vector.broadcast %cst_51 : f32 to vector<2x32xf32>
      %126 = arith.addf %124, %125 : vector<2x32xf32>
      %cst_52 = arith.constant 5.000000e-01 : f32
      %127 = vector.broadcast %cst_52 : f32 to vector<2x32xf32>
      %128 = arith.mulf %127, %126 : vector<2x32xf32>
      %129 = vector.extract_strided_slice %120 {offsets = [0, 32], sizes = [2, 32], strides = [1, 1]} : vector<2x128xf32> to vector<2x32xf32>
      %cst_53 = arith.constant 5.000000e-01 : f32
      %130 = vector.broadcast %cst_53 : f32 to vector<2x32xf32>
      %131 = arith.mulf %130, %129 : vector<2x32xf32>
      %132 = math.tanh %131 : vector<2x32xf32>
      %cst_54 = arith.constant 1.000000e+00 : f32
      %133 = vector.broadcast %cst_54 : f32 to vector<2x32xf32>
      %134 = arith.addf %132, %133 : vector<2x32xf32>
      %cst_55 = arith.constant 5.000000e-01 : f32
      %135 = vector.broadcast %cst_55 : f32 to vector<2x32xf32>
      %136 = arith.mulf %135, %134 : vector<2x32xf32>
      %137 = vector.extract_strided_slice %120 {offsets = [0, 64], sizes = [2, 32], strides = [1, 1]} : vector<2x128xf32> to vector<2x32xf32>
      %138 = math.tanh %137 : vector<2x32xf32>
      %139 = vector.extract_strided_slice %120 {offsets = [0, 96], sizes = [2, 32], strides = [1, 1]} : vector<2x128xf32> to vector<2x32xf32>
      %cst_56 = arith.constant 5.000000e-01 : f32
      %140 = vector.broadcast %cst_56 : f32 to vector<2x32xf32>
      %141 = arith.mulf %140, %139 : vector<2x32xf32>
      %142 = math.tanh %141 : vector<2x32xf32>
      %cst_57 = arith.constant 1.000000e+00 : f32
      %143 = vector.broadcast %cst_57 : f32 to vector<2x32xf32>
      %144 = arith.addf %142, %143 : vector<2x32xf32>
      %cst_58 = arith.constant 5.000000e-01 : f32
      %145 = vector.broadcast %cst_58 : f32 to vector<2x32xf32>
      %146 = arith.mulf %145, %144 : vector<2x32xf32>
      %147 = arith.mulf %136, %111 : vector<2x32xf32>
      %148 = arith.mulf %128, %138 : vector<2x32xf32>
      %149 = arith.addf %147, %148 : vector<2x32xf32>
      %150 = math.tanh %149 : vector<2x32xf32>
      %151 = arith.mulf %146, %150 : vector<2x32xf32>
      %c0_59 = arith.constant 0 : index
      %c0_60 = arith.constant 0 : index
      %152 = vector.load %arg8[%c0_59, %c0_60] : memref<32x128xf32, #tpu.memory_space<vmem>>, vector<32x128xf32>
      %cst_61 = arith.constant dense<0.000000e+00> : vector<2x128xf32>
      %153 = tpu.matmul %151, %152, %cst_61 {dimension_numbers = #tpu.dot_dimension_numbers<[1], [0], [0], [1], [0, 0, 1, 1], [], []>} : vector<2x32xf32>, vector<32x128xf32>, vector<2x128xf32> -> vector<2x128xf32>
      %c0_62 = arith.constant 0 : index
      %c0_63 = arith.constant 0 : index
      %154 = vector.load %arg9[%c0_62, %c0_63] : memref<1x128xf32, #tpu.memory_space<vmem>>, vector<1x128xf32>
      %155 = vector.broadcast %154 : vector<1x128xf32> to vector<2x128xf32>
      %156 = arith.addf %153, %155 : vector<2x128xf32>
      %c0_64 = arith.constant 0 : index
      %c0_65 = arith.constant 0 : index
      %157 = vector.load %arg10[%c0_64, %c0_65] : memref<2x128xf32, #tpu.memory_space<vmem>>, vector<2x128xf32>
      tpu.vector_store %arg10[%c0_64, %c0_65], %156 {strides = array<i32>} : memref<2x128xf32, #tpu.memory_space<vmem>>, vector<2x128xf32>,
    } else {
    }
    return
  }
  func.func @transform_0(%arg0: i32) -> (i32, i32) {
    %c0_i32 = arith.constant 0 : i32
    %c0_i32_0 = arith.constant 0 : i32
    return %c0_i32, %arg0 : i32, i32
  }
  func.func @transform_1(%arg0: i32) -> (i32, i32) {
    %c0_i32 = arith.constant 0 : i32
    %c0_i32_0 = arith.constant 0 : i32
    %c0_i32_1 = arith.constant 0 : i32
    return %c0_i32, %c0_i32_0 : i32, i32
  }
  func.func @transform_2(%arg0: i32) -> (i32, i32) {
    %c0_i32 = arith.constant 0 : i32
    %c0_i32_0 = arith.constant 0 : i32
    %c0_i32_1 = arith.constant 0 : i32
    return %c0_i32, %c0_i32_0 : i32, i32
  }
  func.func @transform_3(%arg0: i32) -> (i32, i32) {
    %c0_i32 = arith.constant 0 : i32
    %c0_i32_0 = arith.constant 0 : i32
    %c0_i32_1 = arith.constant 0 : i32
    return %c0_i32, %c0_i32_0 : i32, i32
  }
  func.func @transform_4(%arg0: i32) -> (i32, i32) {
    %c0_i32 = arith.constant 0 : i32
    %c0_i32_0 = arith.constant 0 : i32
    %c0_i32_1 = arith.constant 0 : i32
    return %c0_i32, %c0_i32_0 : i32, i32
  }
  func.func @transform_5(%arg0: i32) -> (i32, i32) {
    %c0_i32 = arith.constant 0 : i32
    %c0_i32_0 = arith.constant 0 : i32
    %c0_i32_1 = arith.constant 0 : i32
    return %c0_i32, %c0_i32_0 : i32, i32
  }
  func.func @transform_6(%arg0: i32) -> (i32, i32) {
    %c0_i32 = arith.constant 0 : i32
    %c0_i32_0 = arith.constant 0 : i32
    %c0_i32_1 = arith.constant 0 : i32
    return %c0_i32, %c0_i32_0 : i32, i32
  }
  func.func @transform_7(%arg0: i32) -> (i32, i32) {
    %c0_i32 = arith.constant 0 : i32
    %c0_i32_0 = arith.constant 0 : i32
    %c0_i32_1 = arith.constant 0 : i32
    return %c0_i32, %c0_i32_0 : i32, i32
  }
  func.func @transform_8(%arg0: i32) -> (i32, i32) {
    %c0_i32 = arith.constant 0 : i32
    %c0_i32_0 = arith.constant 0 : i32
    %c0_i32_1 = arith.constant 0 : i32
    return %c0_i32, %c0_i32_0 : i32, i32
  }
  func.func @transform_9(%arg0: i32) -> (i32, i32) {
    %c0_i32 = arith.constant 0 : i32
    %c0_i32_0 = arith.constant 0 : i32
    %c0_i32_1 = arith.constant 0 : i32
    return %c0_i32, %c0_i32_0 : i32, i32
  }
}

</mosaic_0001>

<llo_original>
// kernel: tpu_custom_call.1
$region0: #{tpu_custom_call.1}
  #allocation0 [shape = 'u32[]', space=smem, size = 0x4, offset = 0x4, fixed_abs, tag = 'smem constant byte address 0x4 - core index']
  #allocation1 [shape = 'u32[72,128]{1,0:T(1,128)}', space=vmem, size = 0x9000, scoped, tag = 'internal scratch']
  #allocation2 [shape = 'f32[24,128]{1,0:T(8,128)}', space=vmem, size = 0x3000, scoped, tag = 'scratch operand']
  %s0 = inlined_call_operand.hbm [shape: f32[24,640], index: 0, kind: input, shape index: {}]
  %s1 = inlined_call_operand.hbm [shape: f32[6,24], index: 1, kind: input, shape index: {}]
  %s2 = inlined_call_operand.hbm [shape: f32[24,32], index: 2, kind: input, shape index: {}]
  %s3 = inlined_call_operand.vmem [shape: f32[1,32], index: 3, kind: input, shape index: {}]
  %s4 = inlined_call_operand.hbm [shape: f32[32,128], index: 4, kind: input, shape index: {}]
  %s5 = inlined_call_operand.hbm [shape: f32[32,128], index: 5, kind: input, shape index: {}]
  %s6 = inlined_call_operand.vmem [shape: f32[1,128], index: 6, kind: input, shape index: {}]
  %s7 = inlined_call_operand.hbm [shape: f32[32,128], index: 7, kind: input, shape index: {}]
  %s8 = inlined_call_operand.vmem [shape: f32[1,128], index: 8, kind: input, shape index: {}]
  %s9 = inlined_call_operand.hbm [shape: f32[2,128], index: 9, kind: output, shape index: {}]
  %s10 = sld [smem:[#allocation0]]
  $region78: #{tpu_custom_call.1} parent=0
    _
  %s12 = ssub.s32 1, %s10
  %s13 = scalar_select 0, %s12, %s10
  $region1: #{tpu_custom_call.1} parent=0
    #allocation3 [shape = 'u8[61440]{0}', space=vmem, size = 0xf000, scoped, tag = 'input window, operand 0, single buffered']
    #allocation4 [shape = 's32[1]{0}', space=sflag, size = 0x4, scoped, tag = 'scoped memory for tpu_custom_call.1']
    #allocation5 [shape = 's32[1]{0}', space=sflag, size = 0x4, scoped, tag = 'scoped memory for tpu_custom_call.1']
    #allocation6 [shape = 'u8[4096]{0}', space=vmem, size = 0x1000, scoped, tag = 'input window, operand 1, single buffered']
    #allocation7 [shape = 's32[1]{0}', space=sflag, size = 0x4, scoped, tag = 'scoped memory for tpu_custom_call.1']
    #allocation8 [shape = 'u8[12288]{0}', space=vmem, size = 0x3000, scoped, tag = 'input window, operand 2, single buffered']
    #allocation9 [shape = 'u8[16384]{0}', space=vmem, size = 0x4000, scoped, tag = 'input window, operand 4, single buffered']
    #allocation10 [shape = 's32[1]{0}', space=sflag, size = 0x4, scoped, tag = 'scoped memory for tpu_custom_call.1']
    #allocation11 [shape = 'u8[16384]{0}', space=vmem, size = 0x4000, scoped, tag = 'input window, operand 5, single buffered']
    #allocation12 [shape = 'u8[16384]{0}', space=vmem, size = 0x4000, scoped, tag = 'input window, operand 7, single buffered']
    #allocation13 [shape = 's32[1]{0}', space=sflag, size = 0x4, scoped, tag = 'scoped memory for tpu_custom_call.1']
    #allocation14 [shape = 'u8[1024]{0}', space=vmem, size = 0x400, scoped, tag = 'output window, operand 0, single buffered']
    %14 = vsyncpa [#allocation4], 0
    %15 = vsyncpa [#allocation7], 0
    %16 = vsyncpa [#allocation10], 0
    %17 = vsyncpa [#allocation13], 0
    %18 = vsyncpa [#allocation5], 0
    // Predicated region
    $region2: #{tpu_custom_call.1} parent=1 // pred_check
      _
    $region3: #{tpu_custom_call.1} parent=1 // pred_check_branch
      %20 = sbr.rel (0) target = $region5
    $region4: #{tpu_custom_call.1} parent=1 // pred_region
      %22 = vsyncadd [#allocation4], 0
      %s23 = sshll.u32 %s0, 4
      %s24 = int_to_ptr.hbm [resolvable:$true] %s23
      %s25 = sshll.u32 [#allocation3], 4
      %s26 = int_to_ptr.vmem [resolvable:$true] %s25
      %31 = dma.hbm_to_vmem [thread:$0]  %s24, 1920, %s26, [#allocation4], 640, 640, 40
    $region5: #{tpu_custom_call.1} parent=1 // pred_fallthru
      _
    // Predicated region
    $region6: #{tpu_custom_call.1} parent=1 // pred_check
      _
    $region7: #{tpu_custom_call.1} parent=1 // pred_check_branch
      %33 = sbr.rel (0) target = $region9
    $region8: #{tpu_custom_call.1} parent=1 // pred_region
      %35 = vsyncadd [#allocation7], 0
      %s37 = sshll.u32 %s1, 4
      %s38 = int_to_ptr.hbm [resolvable:$true] %s37
      %s39 = sshll.u32 [#allocation6], 4
      %s40 = int_to_ptr.vmem [resolvable:$true] %s39
      %42 = dma.hbm_to_vmem [thread:$0]  %s38, 128, %s40, [#allocation7]
    $region9: #{tpu_custom_call.1} parent=1 // pred_fallthru
      _
    // Predicated region
    $region10: #{tpu_custom_call.1} parent=1 // pred_check
      _
    $region11: #{tpu_custom_call.1} parent=1 // pred_check_branch
      %44 = sbr.rel (0) target = $region13
    $region12: #{tpu_custom_call.1} parent=1 // pred_region
      %46 = vsyncadd [#allocation7], 0
      %s47 = sshll.u32 %s2, 4
      %s48 = int_to_ptr.hbm [resolvable:$true] %s47
      %s49 = sshll.u32 [#allocation8], 4
      %s50 = int_to_ptr.vmem [resolvable:$true] %s49
      %55 = dma.hbm_to_vmem [thread:$0]  %s48, 384, %s50, [#allocation7], 128, 128, 8
    $region13: #{tpu_custom_call.1} parent=1 // pred_fallthru
      _
    // Predicated region
    $region14: #{tpu_custom_call.1} parent=1 // pred_check
      _
    $region15: #{tpu_custom_call.1} parent=1 // pred_check_branch
      %57 = sbr.rel (0) target = $region17
    $region16: #{tpu_custom_call.1} parent=1 // pred_region
      _
    $region17: #{tpu_custom_call.1} parent=1 // pred_fallthru
      _
    // Predicated region
    $region18: #{tpu_custom_call.1} parent=1 // pred_check
      _
    $region19: #{tpu_custom_call.1} parent=1 // pred_check_branch
      %59 = sbr.rel (0) target = $region21
    $region20: #{tpu_custom_call.1} parent=1 // pred_region
      %61 = vsyncadd [#allocation10], 0
      %s62 = sshll.u32 %s4, 4
      %s63 = int_to_ptr.hbm [resolvable:$true] %s62
      %s64 = sshll.u32 [#allocation9], 4
      %s65 = int_to_ptr.vmem [resolvable:$true] %s64
      %70 = dma.hbm_to_vmem [thread:$0]  %s63, 512, %s65, [#allocation10], 128, 128, 8
    $region21: #{tpu_custom_call.1} parent=1 // pred_fallthru
      _
    // Predicated region
    $region22: #{tpu_custom_call.1} parent=1 // pred_check
      _
    $region23: #{tpu_custom_call.1} parent=1 // pred_check_branch
      %72 = sbr.rel (0) target = $region25
    $region24: #{tpu_custom_call.1} parent=1 // pred_region
      %74 = vsyncadd [#allocation10], 0
      %s75 = sshll.u32 %s5, 4
      %s76 = int_to_ptr.hbm [resolvable:$true] %s75
      %s77 = sshll.u32 [#allocation11], 4
      %s78 = int_to_ptr.vmem [resolvable:$true] %s77
      %83 = dma.hbm_to_vmem [thread:$0]  %s76, 512, %s78, [#allocation10], 128, 128, 8
    $region25: #{tpu_custom_call.1} parent=1 // pred_fallthru
      _
    // Predicated region
    $region26: #{tpu_custom_call.1} parent=1 // pred_check
      _
    $region27: #{tpu_custom_call.1} parent=1 // pred_check_branch
      %85 = sbr.rel (0) target = $region29
    $region28: #{tpu_custom_call.1} parent=1 // pred_region
      _
    $region29: #{tpu_custom_call.1} parent=1 // pred_fallthru
      _
    // Predicated region
    $region30: #{tpu_custom_call.1} parent=1 // pred_check
      _
    $region31: #{tpu_custom_call.1} parent=1 // pred_check_branch
      %87 = sbr.rel (0) target = $region33
    $region32: #{tpu_custom_call.1} parent=1 // pred_region
      %89 = vsyncadd [#allocation13], 0
      %s90 = sshll.u32 %s7, 4
      %s91 = int_to_ptr.hbm [resolvable:$true] %s90
      %s92 = sshll.u32 [#allocation12], 4
      %s93 = int_to_ptr.vmem [resolvable:$true] %s92
      %98 = dma.hbm_to_vmem [thread:$0]  %s91, 512, %s93, [#allocation13], 128, 128, 8
    $region33: #{tpu_custom_call.1} parent=1 // pred_fallthru
      _
    // Predicated region
    $region34: #{tpu_custom_call.1} parent=1 // pred_check
      _
    $region35: #{tpu_custom_call.1} parent=1 // pred_check_branch
      %100 = sbr.rel (0) target = $region37
    $region36: #{tpu_custom_call.1} parent=1 // pred_region
      _
    $region37: #{tpu_custom_call.1} parent=1 // pred_fallthru
      _
    // Predicated region
    $region38: #{tpu_custom_call.1} parent=1 // pred_check
      _
    $region39: #{tpu_custom_call.1} parent=1 // pred_check_branch
      %102 = sbr.rel (0) target = $region41
    $region40: #{tpu_custom_call.1} parent=1 // pred_region
      %104 = dma.done [#allocation4], 1920
    $region41: #{tpu_custom_call.1} parent=1 // pred_fallthru
      _
    // Predicated region
    $region42: #{tpu_custom_call.1} parent=1 // pred_check
      _
    $region43: #{tpu_custom_call.1} parent=1 // pred_check_branch
      %106 = sbr.rel (0) target = $region45
    $region44: #{tpu_custom_call.1} parent=1 // pred_region
      %108 = dma.done [#allocation7], 128
    $region45: #{tpu_custom_call.1} parent=1 // pred_fallthru
      _
    // Predicated region
    $region46: #{tpu_custom_call.1} parent=1 // pred_check
      _
    $region47: #{tpu_custom_call.1} parent=1 // pred_check_branch
      %110 = sbr.rel (0) target = $region49
    $region48: #{tpu_custom_call.1} parent=1 // pred_region
      %112 = dma.done [#allocation7], 384
    $region49: #{tpu_custom_call.1} parent=1 // pred_fallthru
      _
    // Predicated region
    $region50: #{tpu_custom_call.1} parent=1 // pred_check
      _
    $region51: #{tpu_custom_call.1} parent=1 // pred_check_branch
      %114 = sbr.rel (0) target = $region53
    $region52: #{tpu_custom_call.1} parent=1 // pred_region
      %116 = dma.done [#allocation10], 512
    $region53: #{tpu_custom_call.1} parent=1 // pred_fallthru
      _
    // Predicated region
    $region54: #{tpu_custom_call.1} parent=1 // pred_check
      _
    $region55: #{tpu_custom_call.1} parent=1 // pred_check_branch
      %118 = sbr.rel (0) target = $region57
    $region56: #{tpu_custom_call.1} parent=1 // pred_region
      %120 = dma.done [#allocation10], 512
    $region57: #{tpu_custom_call.1} parent=1 // pred_fallthru
      _
    // Predicated region
    $region58: #{tpu_custom_call.1} parent=1 // pred_check
      _
    $region59: #{tpu_custom_call.1} parent=1 // pred_check_branch
      %122 = sbr.rel (0) target = $region61
    $region60: #{tpu_custom_call.1} parent=1 // pred_region
      %124 = dma.done [#allocation13], 512
    $region61: #{tpu_custom_call.1} parent=1 // pred_fallthru
      _
    %p125 = scmp.eq.s32.totalorder 0, 0
    // Predicated region
    $region62: #{tpu_custom_call.1} parent=1 // pred_check
      %p126 = pneg %p125
    $region63: #{tpu_custom_call.1} parent=1 // pred_check_branch
      %128 = sbr.rel (%p126) target = $region65
    $region64: #{tpu_custom_call.1} parent=1 // pred_region
      %129 = vst [vmem:[#allocation2] sm:$0xff] 0.0
      %130 = vst [vmem:[#allocation2 + $0x8] sm:$0xff] 0.0
      %131 = vst [vmem:[#allocation2 + $0x10] sm:$0xff] 0.0
    $region65: #{tpu_custom_call.1} parent=1 // pred_fallthru
      _
    %v132 = vld [vmem:[#allocation3] sm:$0xff]
    %v133 = vld [vmem:[#allocation3 + $0x8] sm:$0xff]
    %v134 = vld [vmem:[#allocation3 + $0x10] sm:$0xff]
    %v135 = vld [vmem:[#allocation3 + $0x18] sm:$0xff]
    %v136 = vld [vmem:[#allocation3 + $0x20] sm:$0xff]
    %v137 = vld [vmem:[#allocation3 + $0x28] sm:$0xff]
    %v138 = vld [vmem:[#allocation3 + $0x30] sm:$0xff]
    %v139 = vld [vmem:[#allocation3 + $0x38] sm:$0xff]
    %v140 = vld [vmem:[#allocation3 + $0x40] sm:$0xff]
    %v141 = vld [vmem:[#allocation3 + $0x48] sm:$0xff]
    %v142 = vld [vmem:[#allocation3 + $0x50] sm:$0xff]
    %v143 = vld [vmem:[#allocation3 + $0x58] sm:$0xff]
    %v144 = vld [vmem:[#allocation3 + $0x60] sm:$0xff]
    %v145 = vld [vmem:[#allocation3 + $0x68] sm:$0xff]
    %v146 = vld [vmem:[#allocation3 + $0x70] sm:$0xff]
    %v147 = vld [vmem:[#allocation2] sm:$0xff]
    %v148 = vld [vmem:[#allocation2 + $0x8] sm:$0xff]
    %v149 = vld [vmem:[#allocation2 + $0x10] sm:$0xff]
    %v150 = vadd.f32 %v147, %v132
    %v151 = vadd.f32 %v148, %v137
    %v152 = vadd.f32 %v149, %v142
    %v153 = vadd.f32 %v150, %v133
    %v154 = vadd.f32 %v151, %v138
    %v155 = vadd.f32 %v152, %v143
    %v156 = vadd.f32 %v153, %v134
    %v157 = vadd.f32 %v154, %v139
    %v158 = vadd.f32 %v155, %v144
    %v159 = vadd.f32 %v156, %v135
    %v160 = vadd.f32 %v157, %v140
    %v161 = vadd.f32 %v158, %v145
    %v162 = vadd.f32 %v159, %v136
    %v163 = vadd.f32 %v160, %v141
    %v164 = vadd.f32 %v161, %v146
    %165 = vst [vmem:[#allocation2] sm:$0xff] %v162
    %166 = vst [vmem:[#allocation2 + $0x8] sm:$0xff] %v163
    %167 = vst [vmem:[#allocation2 + $0x10] sm:$0xff] %v164
    // Predicated region
    $region66: #{tpu_custom_call.1} parent=1 // pred_check
      %p168 = pneg %p125
    $region67: #{tpu_custom_call.1} parent=1 // pred_check_branch
      %170 = sbr.rel (%p168) target = $region69
    $region68: #{tpu_custom_call.1} parent=1 // pred_region
      %v171 = vld [vmem:[#allocation2] sm:$0xff]
      %v172 = vld [vmem:[#allocation2 + $0x8] sm:$0xff]
      %v173 = vld [vmem:[#allocation2 + $0x10] sm:$0xff]
      %174 = vadd.xlane.f32.xlu0 %v171
      %v175 = vpop.xlane.xlu0 %174
      %176 = vadd.xlane.f32.xlu0 %v172
      %v177 = vpop.xlane.xlu0 %176
      %178 = vadd.xlane.f32.xlu0 %v173
      %v179 = vpop.xlane.xlu0 %178
      %v180 = vld [vmem:[#allocation6] sm:$0x3f]
      %v181 = vld [vmem:[#allocation8] sm:$0xff]
      %v182 = vld [vmem:[#allocation8 + $0x8] sm:$0xff]
      %v183 = vld [vmem:[#allocation8 + $0x10] sm:$0xff]
      %v184 = vmul.f32 %v175, %v181
      %v185 = vmul.f32 %v177, %v182
      %v186 = vmul.f32 %v179, %v183
      %v187 = vld [vmem:[%s3] sm:$0x1]
      %v189 = vperm.slane %v187, 0
      %vm191 = vcmask 195584
      %v193 = vsel %vm191, %v180, 0
      %195 = vmatpush.msra.mxu0 0.0
      %196 = vmatpush.msra.mxu0 0.0
      %197 = vmatpush.msra.mxu0 0.0
      %198 = vmatpush.msra.mxu0 0.0
      %199 = vmatpush.msra.mxu0 0.0
      %200 = vmatpush.msra.mxu0 0.0
      %201 = vmatpush.msra.mxu0 0.0
      %202 = vmatpush.msra.mxu0 0.0
      %203 = vmatpush.msra.mxu0 0.0
      %204 = vmatpush.msra.mxu0 0.0
      %205 = vmatpush.msra.mxu0 0.0
      %206 = vmatpush.msra.mxu0 0.0
      %207 = vmatpush.msra.mxu0 0.0
      %208 = vmatpush.msra.mxu0 %v186
      %209 = vmatpush.msra.mxu0 %v185
      %210 = vmatpush.msra.mxu0 %v184
      %211 = vmatmul.f32.gmra.mxu0 %v193
      %v212 = vpop.f32.mrf.mxu0
      %v213 = vadd.f32 %v189, %v212
      %214 = vdwg.mxu0
      %v215 = vmax.f32 %v213, 0.0
      %v217 = vrot.slane %v215, 1
      %v218 = vrot.slane %v215, 2
      %v219 = vrot.slane %v215, 3
      %v220 = vrot.slane %v215, 4
      %v221 = vrot.slane %v215, 5
      %v222 = vld [vmem:[#allocation9] sm:$0xff]
      %v223 = vld [vmem:[#allocation9 + $0x8] sm:$0xff]
      %v224 = vld [vmem:[#allocation9 + $0x10] sm:$0xff]
      %v225 = vld [vmem:[#allocation9 + $0x18] sm:$0xff]
      %v226 = vld [vmem:[#allocation11] sm:$0xff]
      %v227 = vld [vmem:[#allocation11 + $0x8] sm:$0xff]
      %v228 = vld [vmem:[#allocation11 + $0x10] sm:$0xff]
      %v229 = vld [vmem:[#allocation11 + $0x18] sm:$0xff]
      %v230 = vld [vmem:[%s6] sm:$0x1]
      %vm231 = vcmask 261120
      %v233 = vsel %vm231, 0.0, 0
      %235 = vmatpush.msra.mxu0 0.0
      %236 = vmatpush.msra.mxu0 0.0
      %237 = vmatpush.msra.mxu0 0.0
      %238 = vmatpush.msra.mxu0 0.0
      %239 = vmatpush.msra.mxu0 0.0
      %240 = vmatpush.msra.mxu0 0.0
      %241 = vmatpush.msra.mxu0 0.0
      %242 = vmatpush.msra.mxu0 0.0
      %243 = vmatpush.msra.mxu0 0.0
      %244 = vmatpush.msra.mxu0 0.0
      %245 = vmatpush.msra.mxu0 0.0
      %246 = vmatpush.msra.mxu0 0.0
      %247 = vmatpush.msra.mxu0 %v229
      %248 = vmatpush.msra.mxu0 %v228
      %249 = vmatpush.msra.mxu0 %v227
      %250 = vmatpush.msra.mxu0 %v226
      %251 = vmatmul.f32.gmra.mxu0 %v233
      %v252 = vpop.f32.mrf.mxu0
      %v253 = vadd.f32 0.0, %v252
      %254 = vdwg.mxu0
      %255 = vst [vmem:[#allocation1] ss:$9 sm:$0xff] %v215
      %s256 = scalar_lea.vmem [#allocation1], 1
      %257 = vst [vmem:[%s256] ss:$9 sm:$0xff] %v219
      %v258 = vld [vmem:[#allocation1] sm:$0xff]
      %v259 = vsel %vm231, %v258, 0
      %261 = vmatpush.msra.mxu0 0.0
      %262 = vmatpush.msra.mxu0 0.0
      %263 = vmatpush.msra.mxu0 0.0
      %264 = vmatpush.msra.mxu0 0.0
      %265 = vmatpush.msra.mxu0 0.0
      %266 = vmatpush.msra.mxu0 0.0
      %267 = vmatpush.msra.mxu0 0.0
      %268 = vmatpush.msra.mxu0 0.0
      %269 = vmatpush.msra.mxu0 0.0
      %270 = vmatpush.msra.mxu0 0.0
      %271 = vmatpush.msra.mxu0 0.0
      %272 = vmatpush.msra.mxu0 0.0
      %273 = vmatpush.msra.mxu0 %v225
      %274 = vmatpush.msra.mxu0 %v224
      %275 = vmatpush.msra.mxu0 %v223
      %276 = vmatpush.msra.mxu0 %v222
      %277 = vmatmul.f32.gmra.mxu0 %v259
      %v278 = vpop.f32.mrf.mxu0
      %v279 = vadd.f32 %v253, %v278
      %280 = vdwg.mxu0
      %v282 = vperm.slane %v230, 0
      %v284 = vadd.f32 %v279, %v282
      %v285 = vmul.f32 %v284, 0.5
      %v286 = vtanh.pop %v285
      %v287 = vadd.f32 %v286, 1.0
      %v288 = vmul.f32 %v287, 0.5
      %v289 = vtanh.pop %v284
      %v290 = vmul.f32 %v288, 0.0
      %292 = vrot.lane.b32.xlu0 %v289, 64
      %v293 = vpop.permute.xlu0 %292
      %v295 = vmul.f32 %v288, %v293
      %297 = vrot.lane.b32.xlu0 %v295, 32
      %v298 = vpop.permute.xlu0 %297
      %v300 = vadd.f32 %v290, %v298
      %v301 = vtanh.pop %v300
      %303 = vrot.lane.b32.xlu0 %v301, 64
      %v304 = vpop.permute.xlu0 %303
      %v306 = vmul.f32 %v288, %v304
      %308 = vrot.lane.b32.xlu0 %v306, 32
      %v309 = vpop.permute.xlu0 %308
      %v310 = vsel %vm231, %v309, 0
      %312 = vmatpush.msra.mxu0 0.0
      %313 = vmatpush.msra.mxu0 0.0
      %314 = vmatpush.msra.mxu0 0.0
      %315 = vmatpush.msra.mxu0 0.0
      %316 = vmatpush.msra.mxu0 0.0
      %317 = vmatpush.msra.mxu0 0.0
      %318 = vmatpush.msra.mxu0 0.0
      %319 = vmatpush.msra.mxu0 0.0
      %320 = vmatpush.msra.mxu0 0.0
      %321 = vmatpush.msra.mxu0 0.0
      %322 = vmatpush.msra.mxu0 0.0
      %323 = vmatpush.msra.mxu0 0.0
      %324 = vmatpush.msra.mxu0 %v229
      %325 = vmatpush.msra.mxu0 %v228
      %326 = vmatpush.msra.mxu0 %v227
      %327 = vmatpush.msra.mxu0 %v226
      %328 = vmatmul.f32.gmra.mxu0 %v310
      %v329 = vpop.f32.mrf.mxu0
      %v330 = vadd.f32 0.0, %v329
      %331 = vdwg.mxu0
      %332 = vst [vmem:[#allocation1] ss:$9 sm:$0xff] %v217
      %s333 = scalar_lea.vmem [#allocation1], 1
      %334 = vst [vmem:[%s333] ss:$9 sm:$0xff] %v220
      %v335 = vld [vmem:[#allocation1] sm:$0xff]
      %v336 = vsel %vm231, %v335, 0
      %338 = vmatpush.msra.mxu0 0.0
      %339 = vmatpush.msra.mxu0 0.0
      %340 = vmatpush.msra.mxu0 0.0
      %341 = vmatpush.msra.mxu0 0.0
      %342 = vmatpush.msra.mxu0 0.0
      %343 = vmatpush.msra.mxu0 0.0
      %344 = vmatpush.msra.mxu0 0.0
      %345 = vmatpush.msra.mxu0 0.0
      %346 = vmatpush.msra.mxu0 0.0
      %347 = vmatpush.msra.mxu0 0.0
      %348 = vmatpush.msra.mxu0 0.0
      %349 = vmatpush.msra.mxu0 0.0
      %350 = vmatpush.msra.mxu0 %v225
      %351 = vmatpush.msra.mxu0 %v224
      %352 = vmatpush.msra.mxu0 %v223
      %353 = vmatpush.msra.mxu0 %v222
      %354 = vmatmul.f32.gmra.mxu0 %v336
      %v355 = vpop.f32.mrf.mxu0
      %v356 = vadd.f32 %v330, %v355
      %357 = vdwg.mxu0
      %v358 = vadd.f32 %v356, %v282
      %v359 = vmul.f32 %v358, 0.5
      %v360 = vtanh.pop %v359
      %v361 = vadd.f32 %v360, 1.0
      %v362 = vmul.f32 %v361, 0.5
      %v363 = vtanh.pop %v358
      %v364 = vmul.f32 %v362, %v300
      %366 = vrot.lane.b32.xlu0 %v363, 64
      %v367 = vpop.permute.xlu0 %366
      %v369 = vmul.f32 %v362, %v367
      %371 = vrot.lane.b32.xlu0 %v369, 32
      %v372 = vpop.permute.xlu0 %371
      %v374 = vadd.f32 %v364, %v372
      %v375 = vtanh.pop %v374
      %377 = vrot.lane.b32.xlu0 %v375, 64
      %v378 = vpop.permute.xlu0 %377
      %v380 = vmul.f32 %v362, %v378
      %382 = vrot.lane.b32.xlu0 %v380, 32
      %v383 = vpop.permute.xlu0 %382
      %v384 = vsel %vm231, %v383, 0
      %386 = vmatpush.msra.mxu0 0.0
      %387 = vmatpush.msra.mxu0 0.0
      %388 = vmatpush.msra.mxu0 0.0
      %389 = vmatpush.msra.mxu0 0.0
      %390 = vmatpush.msra.mxu0 0.0
      %391 = vmatpush.msra.mxu0 0.0
      %392 = vmatpush.msra.mxu0 0.0
      %393 = vmatpush.msra.mxu0 0.0
      %394 = vmatpush.msra.mxu0 0.0
      %395 = vmatpush.msra.mxu0 0.0
      %396 = vmatpush.msra.mxu0 0.0
      %397 = vmatpush.msra.mxu0 0.0
      %398 = vmatpush.msra.mxu0 %v229
      %399 = vmatpush.msra.mxu0 %v228
      %400 = vmatpush.msra.mxu0 %v227
      %401 = vmatpush.msra.mxu0 %v226
      %402 = vmatmul.f32.gmra.mxu0 %v384
      %v403 = vpop.f32.mrf.mxu0
      %v404 = vadd.f32 0.0, %v403
      %405 = vdwg.mxu0
      %406 = vst [vmem:[#allocation1] ss:$9 sm:$0xff] %v218
      %s407 = scalar_lea.vmem [#allocation1], 1
      %408 = vst [vmem:[%s407] ss:$9 sm:$0xff] %v221
      %v409 = vld [vmem:[#allocation1] sm:$0xff]
      %v410 = vsel %vm231, %v409, 0
      %412 = vmatpush.msra.mxu0 0.0
      %413 = vmatpush.msra.mxu0 0.0
      %414 = vmatpush.msra.mxu0 0.0
      %415 = vmatpush.msra.mxu0 0.0
      %416 = vmatpush.msra.mxu0 0.0
      %417 = vmatpush.msra.mxu0 0.0
      %418 = vmatpush.msra.mxu0 0.0
      %419 = vmatpush.msra.mxu0 0.0
      %420 = vmatpush.msra.mxu0 0.0
      %421 = vmatpush.msra.mxu0 0.0
      %422 = vmatpush.msra.mxu0 0.0
      %423 = vmatpush.msra.mxu0 0.0
      %424 = vmatpush.msra.mxu0 %v225
      %425 = vmatpush.msra.mxu0 %v224
      %426 = vmatpush.msra.mxu0 %v223
      %427 = vmatpush.msra.mxu0 %v222
      %428 = vmatmul.f32.gmra.mxu0 %v410
      %v429 = vpop.f32.mrf.mxu0
      %v430 = vadd.f32 %v404, %v429
      %431 = vdwg.mxu0
      %v432 = vadd.f32 %v430, %v282
      %v433 = vmul.f32 %v432, 0.5
      %v434 = vtanh.pop %v433
      %v435 = vadd.f32 %v434, 1.0
      %v436 = vmul.f32 %v435, 0.5
      %v437 = vtanh.pop %v432
      %v438 = vmul.f32 %v436, %v374
      %440 = vrot.lane.b32.xlu0 %v437, 64
      %v441 = vpop.permute.xlu0 %440
      %v443 = vmul.f32 %v436, %v441
      %445 = vrot.lane.b32.xlu0 %v443, 32
      %v446 = vpop.permute.xlu0 %445
      %v448 = vadd.f32 %v438, %v446
      %v449 = vtanh.pop %v448
      %451 = vrot.lane.b32.xlu0 %v449, 64
      %v452 = vpop.permute.xlu0 %451
      %v454 = vmul.f32 %v436, %v452
      %v455 = vld [vmem:[#allocation12] sm:$0xff]
      %v456 = vld [vmem:[#allocation12 + $0x8] sm:$0xff]
      %v457 = vld [vmem:[#allocation12 + $0x10] sm:$0xff]
      %v458 = vld [vmem:[#allocation12 + $0x18] sm:$0xff]
      %v459 = vld [vmem:[%s8] sm:$0x1]
      %v461 = vperm.slane %v459, 0
      %464 = vrot.lane.b32.xlu0 %v454, 32
      %v465 = vpop.permute.xlu0 %464
      %v466 = vsel %vm231, %v465, 0
      %468 = vmatpush.msra.mxu0 0.0
      %469 = vmatpush.msra.mxu0 0.0
      %470 = vmatpush.msra.mxu0 0.0
      %471 = vmatpush.msra.mxu0 0.0
      %472 = vmatpush.msra.mxu0 0.0
      %473 = vmatpush.msra.mxu0 0.0
      %474 = vmatpush.msra.mxu0 0.0
      %475 = vmatpush.msra.mxu0 0.0
      %476 = vmatpush.msra.mxu0 0.0
      %477 = vmatpush.msra.mxu0 0.0
      %478 = vmatpush.msra.mxu0 0.0
      %479 = vmatpush.msra.mxu0 0.0
      %480 = vmatpush.msra.mxu0 %v458
      %481 = vmatpush.msra.mxu0 %v457
      %482 = vmatpush.msra.mxu0 %v456
      %483 = vmatpush.msra.mxu0 %v455
      %484 = vmatmul.f32.gmra.mxu0 %v466
      %v485 = vpop.f32.mrf.mxu0
      %v486 = vadd.f32 %v461, %v485
      %487 = vdwg.mxu0
      %488 = vst [vmem:[#allocation14] sm:$0x3] %v486
    $region69: #{tpu_custom_call.1} parent=1 // pred_fallthru
      _
    // Predicated region
    $region70: #{tpu_custom_call.1} parent=1 // pred_check
      _
    $region71: #{tpu_custom_call.1} parent=1 // pred_check_branch
      %490 = sbr.rel (0) target = $region73
    $region72: #{tpu_custom_call.1} parent=1 // pred_region
      %492 = vsyncadd [#allocation5], 0
      %s494 = sshll.u32 [#allocation14], 4
      %s495 = int_to_ptr.vmem [resolvable:$true] %s494
      %s496 = sshll.u32 %s9, 4
      %s497 = int_to_ptr.hbm [resolvable:$true] %s496
      %499 = dma.vmem_to_hbm [thread:$0]  %s495, 32, %s497, [#allocation5]
    $region73: #{tpu_custom_call.1} parent=1 // pred_fallthru
      _
    // Predicated region
    $region74: #{tpu_custom_call.1} parent=1 // pred_check
      _
    $region75: #{tpu_custom_call.1} parent=1 // pred_check_branch
      %501 = sbr.rel (0) target = $region77
    $region76: #{tpu_custom_call.1} parent=1 // pred_region
      %503 = dma.done [#allocation5], 32
    $region77: #{tpu_custom_call.1} parent=1 // pred_fallthru
      _
    %504 = vsyncpa [#allocation4], 1
    %505 = vsyncpa [#allocation7], 1
    %506 = vsyncpa [#allocation10], 1
    %507 = vsyncpa [#allocation13], 1
    %508 = vsyncpa [#allocation5], 1

</llo_original>
